<compile_context>
chip_gen: v7x
topology: tpu7x:2x2x1
jax: 0.10.0
libtpu: 0.0.40
codegen_flags: <defaults>
</compile_context>

<pallas_src>
import functools

import jax
import jax.numpy as jnp
import numpy as np
from jax import lax
from jax.experimental import pallas as pl
from jax.experimental.pallas import tpu as pltpu

# FocalLoss default hyper-parameters (module __init__ defaults).
ALPHA = 0.25
GAMMA = 2.0          # static -> explicit square in-kernel
EPS = 1e-9
IGNORE_LABEL = -1.0
WEIGHT = 1.0         # weight=None -> 1.0
SCALE = 1.0
FROM_LOGITS = False
SIZE_AVERAGE = True

LANE = 128                                 # lane width of the flattened axis
ROW_ALIGN = 32                             # covers f32(8)/bf16(16)/int8(32) sublane packing
INPUT_VMEM_BUDGET_BYTES = 16 * 1024 * 1024 # 2 inputs x 2 pipeline buffers live
VMEM_LIMIT_BYTES = 32 * 1024 * 1024        # <= scoped default on v6e/v7x, raised on v5e


def _focal_loss_kernel(pred_ref, label_ref, loss_ref, cnt_ref, *,
                       rows_valid, rows_tile, steps_per_split, needs_mask):
    """One (1, rows_tile, 128) tile of one batch row / row-split half.

    Grid = (batch, row_splits, row_steps).  Per-lane partial sums of the focal
    loss and the valid-sample count accumulate into the VMEM-resident
    (1, 1, 1, 128) output blocks; the cross-lane reduction is deferred to the
    wrapper (tiny (B, nsplit, 128) arrays).
    """
    s = pl.program_id(1)
    k = pl.program_id(2)

    @pl.when(k == 0)
    def _():
        loss_ref[...] = jnp.zeros_like(loss_ref)
        cnt_ref[...] = jnp.zeros_like(cnt_ref)

    # Stream at storage dtype (bf16/int8/f32), upcast in-register; math in f32.
    pred = pred_ref[...].astype(jnp.float32)     # (1, rows_tile, 128)
    label = label_ref[...].astype(jnp.float32)

    if needs_mask:
        # Rows whose *logical* index is >= R (partial edge block, or a
        # clamped/duplicated block from the row-split axis) are neutralized via
        # the label so they feed neither the loss sum nor the sample count.
        row0 = (s * steps_per_split + k) * rows_tile
        row_idx = row0 + lax.broadcasted_iota(jnp.int32, label.shape, 1)
        label = jnp.where(row_idx < rows_valid, label, jnp.float32(IGNORE_LABEL))

    sw = label != IGNORE_LABEL                   # valid-sample mask
    sw_f = sw.astype(jnp.float32)

    if FROM_LOGITS:
        p = pred
    else:
        # sigmoid via tanh: one EUP push per element instead of exp + recip.
        p = 0.5 * jnp.tanh(0.5 * pred) + 0.5

    # alpha carries the mask; no separate `loss * sample_weight` remask needed.
    alpha = sw_f * jnp.where(label > 0.5, ALPHA, 1.0 - ALPHA)
    pt = jnp.where(sw, 1.0 - jnp.abs(label - p), 1.0)
    one_minus_pt = 1.0 - pt
    beta = one_minus_pt * one_minus_pt           # gamma == 2: avoid pow -> exp/log
    loss = -(alpha * beta) * jnp.log(jnp.minimum(pt + EPS, 1.0))

    # Reduce only over the rows (sublane) axis; keep 128 per-lane partials.
    loss_ref[...] += jnp.sum(loss, axis=1)[None, None]
    cnt_ref[...] += jnp.sum(sw_f, axis=1)[None, None]


def _focal_terms(pred_f32, label_f32):
    """Plain-JAX focal terms (used only for the <128-elem per-batch lane tail)."""
    sw = label_f32 != IGNORE_LABEL
    sw_f = sw.astype(jnp.float32)
    p = pred_f32 if FROM_LOGITS else jax.nn.sigmoid(pred_f32)
    alpha = sw_f * jnp.where(label_f32 > 0.5, ALPHA, 1.0 - ALPHA)
    pt = jnp.where(sw, 1.0 - jnp.abs(label_f32 - p), 1.0)
    beta = (1.0 - pt) * (1.0 - pt)
    loss = -(alpha * beta) * jnp.log(jnp.minimum(pt + EPS, 1.0))
    return loss, sw_f


def _select_rows_tile(R, bytes_per_elem_pair, max_rows_tile):
    """Largest 32-aligned row tile whose double-buffered inputs fit the budget."""
    budget_rows = INPUT_VMEM_BUDGET_BYTES // (2 * LANE * bytes_per_elem_pair)
    cap = budget_rows if max_rows_tile is None else min(budget_rows, max_rows_tile)
    cap = max(cap, ROW_ALIGN)
    if R <= cap:
        return R                                  # whole reduction axis in one block
    return max(ROW_ALIGN, (cap // ROW_ALIGN) * ROW_ALIGN)


@functools.partial(jax.jit, static_argnames=("max_rows_tile", "row_splits"))
def focal_loss(pred, label, *, max_rows_tile=None, row_splits=None):
    """pred, label: (B, C, H, W) (or any (B, ...)).  Returns per-batch loss (B,)."""
    B = pred.shape[0]
    n = int(np.prod(pred.shape[1:]))

    # Free, contiguous metadata reshape; no dtype cast (stream native dtypes).
    pred2 = pred.reshape(B, n)
    label2 = label.reshape(B, n)

    lsum = jnp.zeros((B,), jnp.float32)
    csum = jnp.zeros((B,), jnp.float32)

    n_main = (n // LANE) * LANE
    if n_main:
        if n_main == n:
            pred_main, label_main = pred2, label2          # no copy
        else:
            # TODO(synk): this prefix slice materializes a copy before the
            # custom call; a fully copy-free ragged path needs in-kernel lane
            # masks on a 2D (B, n) layout.
            pred_main = pred2[:, :n_main]
            label_main = label2[:, :n_main]

        R = n_main // LANE
        pred3 = pred_main.reshape(B, R, LANE)
        label3 = label_main.reshape(B, R, LANE)

        bytes_pair = pred.dtype.itemsize + label.dtype.itemsize
        rows_tile = _select_rows_tile(R, bytes_pair, max_rows_tile)
        nb_rows = -(-R // rows_tile)                       # number of row blocks

        # 2-way "parallel" row split so small/odd-B workloads can use both
        # TensorCores on v7x; only auto-enabled when the (<=1 block) duplicate
        # read it may cause is negligible.  No-op cost-wise on v5e/v6e for
        # large nb_rows.
        if row_splits is None:
            nsplit = 2 if (B % 2 == 1 and nb_rows >= 8) else 1
        else:
            nsplit = max(1, int(row_splits))
        nsplit = min(nsplit, nb_rows)

        steps_per_split = -(-nb_rows // nsplit)
        needs_mask = (nsplit * steps_per_split * rows_tile) != R
        last_block = nb_rows - 1

        def in_map(b, s, k):
            # Clamp so a logically-out-of-range block (odd split) re-reads the
            # last valid block; its rows are masked in-kernel via row_idx >= R.
            return (b, jnp.minimum(s * steps_per_split + k, last_block), 0)

        def out_map(b, s, k):
            return (b, s, 0, 0)

        kernel = functools.partial(
            _focal_loss_kernel, rows_valid=R, rows_tile=rows_tile,
            steps_per_split=steps_per_split, needs_mask=needs_mask)

        loss_part, cnt_part = pl.pallas_call(
            kernel,
            out_shape=(jax.ShapeDtypeStruct((B, nsplit, 1, LANE), jnp.float32),
                       jax.ShapeDtypeStruct((B, nsplit, 1, LANE), jnp.float32)),
            grid_spec=pltpu.PrefetchScalarGridSpec(
                num_scalar_prefetch=0,
                grid=(B, nsplit, steps_per_split),
                in_specs=[
                    pl.BlockSpec((1, rows_tile, LANE), in_map),
                    pl.BlockSpec((1, rows_tile, LANE), in_map),
                ],
                out_specs=[
                    pl.BlockSpec((1, 1, 1, LANE), out_map),
                    pl.BlockSpec((1, 1, 1, LANE), out_map),
                ],
            ),
            compiler_params=pltpu.CompilerParams(
                dimension_semantics=("parallel", "parallel", "arbitrary"),
                vmem_limit_bytes=VMEM_LIMIT_BYTES,
            ),
        )(pred3, label3)

        # Single fused post-kernel op: cross-lane + cross-split reduction on
        # tiny (B, nsplit, 128) partials.  (In-kernel epilogue reduction is a
        # minor latency-only win; kept in the wrapper for simplicity.)
        lsum = lsum + jnp.sum(loss_part, axis=(1, 2, 3))
        csum = csum + jnp.sum(cnt_part, axis=(1, 2, 3))

    if n_main < n:
        # <128-element per-batch lane tail handled in plain JAX (no jnp.pad
        # double pass over the full tensors).
        tail_loss, tail_sw = _focal_terms(pred2[:, n_main:].astype(jnp.float32),
                                          label2[:, n_main:].astype(jnp.float32))
        lsum = lsum + jnp.sum(tail_loss, axis=1)
        csum = csum + jnp.sum(tail_sw, axis=1)

    if SIZE_AVERAGE:
        return (SCALE * WEIGHT) * lsum / (csum + EPS)
    return (SCALE * WEIGHT) * lsum


def focal_loss_reference(pred, label):
    """Pure-JAX reference mirroring the PyTorch forward exactly (f32 math)."""
    pred = pred.astype(jnp.float32)
    label = label.astype(jnp.float32)
    one_hot = label > 0.5
    sw = label != IGNORE_LABEL
    sw_f = sw.astype(jnp.float32)
    p = jax.nn.sigmoid(pred) if not FROM_LOGITS else pred
    alpha = jnp.where(one_hot, ALPHA * sw_f, (1.0 - ALPHA) * sw_f)
    pt = jnp.where(sw, 1.0 - jnp.abs(label - p), jnp.ones_like(p))
    beta = (1.0 - pt) ** GAMMA
    loss = -alpha * beta * jnp.log(jnp.minimum(pt + EPS, 1.0))
    loss = WEIGHT * (loss * sw_f)
    axes = tuple(range(1, label.ndim))
    tsum = jnp.sum(sw_f, axis=axes)
    lsum = jnp.sum(loss, axis=axes)
    if SIZE_AVERAGE:
        return SCALE * lsum / (tsum + EPS)
    return SCALE * lsum


if __name__ == "__main__":
    key = jax.random.PRNGKey(0)
    k_pred, k_label, k_ign = jax.random.split(key, 3)

    # Test 1: main path.  B=2, C=4, H=W=16 -> n = 1024 (multiple of 128, no
    # copies, single grid step, no row split).  f32 pred/label.
    B, C, H, W = 2, 4, 16, 16
    pred = jax.random.normal(k_pred, (B, C, H, W), dtype=jnp.float32)
    label = (jax.random.uniform(k_label, (B, C, H, W)) > 0.5).astype(jnp.float32)
    ignore_mask = jax.random.uniform(k_ign, (B, C, H, W)) < 0.1
    label = jnp.where(ignore_mask, IGNORE_LABEL, label)

    out = focal_loss(pred, label)
    jax.block_until_ready(out)
    ref = focal_loss_reference(pred, label)
    np.testing.assert_allclose(np.asarray(out), np.asarray(ref),
                               rtol=1e-4, atol=1e-6)

    # Test 2: narrow streaming (bf16 pred + int8 label), multi-step reduction,
    # forced 2-way row split with clamped/masked duplicate block.  B=1, n=12288.
    k2p, k2l, k2i = jax.random.split(jax.random.PRNGKey(1), 3)
    B2, C2, H2, W2 = 1, 3, 64, 64
    pred_b = jax.random.normal(k2p, (B2, C2, H2, W2), dtype=jnp.float32)
    pred_bf16 = pred_b.astype(jnp.bfloat16)
    lbl = (jax.random.uniform(k2l, (B2, C2, H2, W2)) > 0.5).astype(jnp.int8)
    lbl = jnp.where(jax.random.uniform(k2i, (B2, C2, H2, W2)) < 0.1,
                    jnp.int8(-1), lbl)
    out_b = focal_loss(pred_bf16, lbl, max_rows_tile=32, row_splits=2)
    jax.block_until_ready(out_b)
    ref_b = focal_loss_reference(pred_bf16, lbl)   # same upcast-then-compute semantics
    np.testing.assert_allclose(np.asarray(out_b), np.asarray(ref_b),
                               rtol=1e-4, atol=1e-5)

    # Test 3: ragged lane tail (n % 128 != 0) -> kernel on the aligned prefix,
    # tail in plain JAX; also exercises the partial last row block.
    k3p, k3l, k3i = jax.random.split(jax.random.PRNGKey(2), 3)
    B3, C3, H3, W3 = 2, 3, 37, 41                  # n = 4551
    pred_c = jax.random.normal(k3p, (B3, C3, H3, W3), dtype=jnp.float32)
    label_c = (jax.random.uniform(k3l, (B3, C3, H3, W3)) > 0.5).astype(jnp.float32)
    label_c = jnp.where(jax.random.uniform(k3i, (B3, C3, H3, W3)) < 0.1,
                        IGNORE_LABEL, label_c)
    out_c = focal_loss(pred_c, label_c, max_rows_tile=32)
    jax.block_until_ready(out_c)
    ref_c = focal_loss_reference(pred_c, label_c)
    np.testing.assert_allclose(np.asarray(out_c), np.asarray(ref_c),
                               rtol=1e-4, atol=1e-6)

    print("KERNEL_OK")
</pallas_src>

<mosaic_0001>
module attributes {stable_mosaic.version = 11 : i64} {
  func.func @_focal_loss_kernel(%arg0: i32, %arg1: i32, %arg2: i32, %arg3: memref<1x8x128xf32, #tpu.memory_space<vmem>>, %arg4: memref<1x8x128xf32, #tpu.memory_space<vmem>>, %arg5: memref<1x1x1x128xf32, #tpu.memory_space<vmem>>, %arg6: memref<1x1x1x128xf32, #tpu.memory_space<vmem>>) attributes {dimension_semantics = [#tpu.dimension_semantics<parallel>, #tpu.dimension_semantics<parallel>, #tpu.dimension_semantics<arbitrary>], iteration_bounds = array<i64: 2, 1, 1>, scalar_prefetch = 0 : i64, scratch_operands = 0 : i64, tpu.core_type = #tpu.core_type<tc>, window_params = [{transform_indices = @transform_0, window_bounds = array<i64: 1, 8, 128>}, {transform_indices = @transform_1, window_bounds = array<i64: 1, 8, 128>}, {transform_indices = @transform_2, window_bounds = array<i64: 1, 1, 1, 128>}, {transform_indices = @transform_3, window_bounds = array<i64: 1, 1, 1, 128>}]} {
    %c0_i32 = arith.constant 0 : i32
    %0 = arith.cmpi eq, %arg2, %c0_i32 : i32
    %1 = arith.extui %0 : i1 to i32
    %c0_i32_0 = arith.constant 0 : i32
    %2 = arith.cmpi ne, %1, %c0_i32_0 : i32
    scf.if %2 {
      %cst_36 = arith.constant 0.000000e+00 : f32
      %50 = vector.broadcast %cst_36 : f32 to vector<1x1x1x128xf32>
      %c0_37 = arith.constant 0 : index
      %c0_38 = arith.constant 0 : index
      %c0_39 = arith.constant 0 : index
      %c0_40 = arith.constant 0 : index
      %51 = vector.load %arg5[%c0_37, %c0_38, %c0_39, %c0_40] : memref<1x1x1x128xf32, #tpu.memory_space<vmem>>, vector<1x1x1x128xf32>
      tpu.vector_store %arg5[%c0_37, %c0_38, %c0_39, %c0_40], %50 {strides = array<i32>} : memref<1x1x1x128xf32, #tpu.memory_space<vmem>>, vector<1x1x1x128xf32>,
      %cst_41 = arith.constant 0.000000e+00 : f32
      %52 = vector.broadcast %cst_41 : f32 to vector<1x1x1x128xf32>
      %c0_42 = arith.constant 0 : index
      %c0_43 = arith.constant 0 : index
      %c0_44 = arith.constant 0 : index
      %c0_45 = arith.constant 0 : index
      %53 = vector.load %arg6[%c0_42, %c0_43, %c0_44, %c0_45] : memref<1x1x1x128xf32, #tpu.memory_space<vmem>>, vector<1x1x1x128xf32>
      tpu.vector_store %arg6[%c0_42, %c0_43, %c0_44, %c0_45], %52 {strides = array<i32>} : memref<1x1x1x128xf32, #tpu.memory_space<vmem>>, vector<1x1x1x128xf32>,
    } else {
    }
    %c0 = arith.constant 0 : index
    %c0_1 = arith.constant 0 : index
    %c0_2 = arith.constant 0 : index
    %3 = vector.load %arg3[%c0, %c0_1, %c0_2] : memref<1x8x128xf32, #tpu.memory_space<vmem>>, vector<1x8x128xf32>
    %c0_3 = arith.constant 0 : index
    %c0_4 = arith.constant 0 : index
    %c0_5 = arith.constant 0 : index
    %4 = vector.load %arg4[%c0_3, %c0_4, %c0_5] : memref<1x8x128xf32, #tpu.memory_space<vmem>>, vector<1x8x128xf32>
    %cst = arith.constant -1.000000e+00 : f32
    %5 = vector.broadcast %cst : f32 to vector<1x8x128xf32>
    %6 = arith.cmpf one, %4, %5 : vector<1x8x128xf32>
    %7 = arith.extui %6 : vector<1x8x128xi1> to vector<1x8x128xi32>
    %8 = arith.sitofp %7 : vector<1x8x128xi32> to vector<1x8x128xf32>
    %cst_6 = arith.constant 5.000000e-01 : f32
    %9 = vector.broadcast %cst_6 : f32 to vector<1x8x128xf32>
    %10 = arith.mulf %9, %3 : vector<1x8x128xf32>
    %11 = math.tanh %10 : vector<1x8x128xf32>
    %cst_7 = arith.constant 5.000000e-01 : f32
    %12 = vector.broadcast %cst_7 : f32 to vector<1x8x128xf32>
    %13 = arith.mulf %12, %11 : vector<1x8x128xf32>
    %cst_8 = arith.constant 5.000000e-01 : f32
    %14 = vector.broadcast %cst_8 : f32 to vector<1x8x128xf32>
    %15 = arith.addf %13, %14 : vector<1x8x128xf32>
    %cst_9 = arith.constant 5.000000e-01 : f32
    %16 = vector.broadcast %cst_9 : f32 to vector<1x8x128xf32>
    %17 = arith.cmpf ogt, %4, %16 : vector<1x8x128xf32>
    %cst_10 = arith.constant 2.500000e-01 : f32
    %cst_11 = arith.constant 7.500000e-01 : f32
    %18 = vector.broadcast %cst_10 : f32 to vector<1x8x128xf32>
    %19 = vector.broadcast %cst_11 : f32 to vector<1x8x128xf32>
    %20 = arith.select %17, %18, %19 : vector<1x8x128xi1>, vector<1x8x128xf32>
    %21 = arith.mulf %8, %20 : vector<1x8x128xf32>
    %22 = arith.subf %4, %15 : vector<1x8x128xf32>
    %23 = math.absf %22 : vector<1x8x128xf32>
    %cst_12 = arith.constant 1.000000e+00 : f32
    %24 = vector.broadcast %cst_12 : f32 to vector<1x8x128xf32>
    %25 = arith.subf %24, %23 : vector<1x8x128xf32>
    %cst_13 = arith.constant 1.000000e+00 : f32
    %26 = vector.broadcast %cst_13 : f32 to vector<1x8x128xf32>
    %27 = arith.select %6, %25, %26 : vector<1x8x128xi1>, vector<1x8x128xf32>
    %cst_14 = arith.constant 1.000000e+00 : f32
    %28 = vector.broadcast %cst_14 : f32 to vector<1x8x128xf32>
    %29 = arith.subf %28, %27 : vector<1x8x128xf32>
    %30 = arith.mulf %29, %29 : vector<1x8x128xf32>
    %31 = arith.mulf %21, %30 : vector<1x8x128xf32>
    %cst_15 = arith.constant 0.000000e+00 : f32
    %32 = vector.broadcast %cst_15 : f32 to vector<1x8x128xf32>
    %33 = arith.subf %32, %31 : vector<1x8x128xf32>
    %cst_16 = arith.constant 9.99999971E-10 : f32
    %34 = vector.broadcast %cst_16 : f32 to vector<1x8x128xf32>
    %35 = arith.addf %27, %34 : vector<1x8x128xf32>
    %cst_17 = arith.constant 1.000000e+00 : f32
    %36 = vector.broadcast %cst_17 : f32 to vector<1x8x128xf32>
    %37 = arith.minimumf %35, %36 : vector<1x8x128xf32>
    %38 = math.log %37 : vector<1x8x128xf32>
    %39 = arith.mulf %33, %38 : vector<1x8x128xf32>
    %c0_18 = arith.constant 0 : index
    %c0_19 = arith.constant 0 : index
    %c0_20 = arith.constant 0 : index
    %c0_21 = arith.constant 0 : index
    %40 = vector.load %arg5[%c0_18, %c0_19, %c0_20, %c0_21] : memref<1x1x1x128xf32, #tpu.memory_space<vmem>>, vector<1x1x1x128xf32>
    %cst_22 = arith.constant dense<0.000000e+00> : vector<1x128xf32>
    %41 = vector.multi_reduction <add>, %39, %cst_22 [1] : vector<1x8x128xf32> to vector<1x128xf32>
    %42 = vector.shape_cast %41 : vector<1x128xf32> to vector<1x1x1x128xf32>
    %43 = arith.addf %40, %42 : vector<1x1x1x128xf32>
    %c0_23 = arith.constant 0 : index
    %c0_24 = arith.constant 0 : index
    %c0_25 = arith.constant 0 : index
    %c0_26 = arith.constant 0 : index
    %44 = vector.load %arg5[%c0_23, %c0_24, %c0_25, %c0_26] : memref<1x1x1x128xf32, #tpu.memory_space<vmem>>, vector<1x1x1x128xf32>
    tpu.vector_store %arg5[%c0_23, %c0_24, %c0_25, %c0_26], %43 {strides = array<i32>} : memref<1x1x1x128xf32, #tpu.memory_space<vmem>>, vector<1x1x1x128xf32>,
    %c0_27 = arith.constant 0 : index
    %c0_28 = arith.constant 0 : index
    %c0_29 = arith.constant 0 : index
    %c0_30 = arith.constant 0 : index
    %45 = vector.load %arg6[%c0_27, %c0_28, %c0_29, %c0_30] : memref<1x1x1x128xf32, #tpu.memory_space<vmem>>, vector<1x1x1x128xf32>
    %cst_31 = arith.constant dense<0.000000e+00> : vector<1x128xf32>
    %46 = vector.multi_reduction <add>, %8, %cst_31 [1] : vector<1x8x128xf32> to vector<1x128xf32>
    %47 = vector.shape_cast %46 : vector<1x128xf32> to vector<1x1x1x128xf32>
    %48 = arith.addf %45, %47 : vector<1x1x1x128xf32>
    %c0_32 = arith.constant 0 : index
    %c0_33 = arith.constant 0 : index
    %c0_34 = arith.constant 0 : index
    %c0_35 = arith.constant 0 : index
    %49 = vector.load %arg6[%c0_32, %c0_33, %c0_34, %c0_35] : memref<1x1x1x128xf32, #tpu.memory_space<vmem>>, vector<1x1x1x128xf32>
    tpu.vector_store %arg6[%c0_32, %c0_33, %c0_34, %c0_35], %48 {strides = array<i32>} : memref<1x1x1x128xf32, #tpu.memory_space<vmem>>, vector<1x1x1x128xf32>,
    return
  }
  func.func @transform_0(%arg0: i32, %arg1: i32, %arg2: i32) -> (i32, i32, i32) {
    %c1_i32 = arith.constant 1 : i32
    %0 = arith.muli %arg1, %c1_i32 : i32
    %1 = arith.addi %0, %arg2 : i32
    %c0_i32 = arith.constant 0 : i32
    %2 = arith.minsi %1, %c0_i32 : i32
    %c0_i32_0 = arith.constant 0 : i32
    %c0_i32_1 = arith.constant 0 : i32
    return %arg0, %2, %c0_i32_0 : i32, i32, i32
  }
  func.func @transform_1(%arg0: i32, %arg1: i32, %arg2: i32) -> (i32, i32, i32) {
    %c1_i32 = arith.constant 1 : i32
    %0 = arith.muli %arg1, %c1_i32 : i32
    %1 = arith.addi %0, %arg2 : i32
    %c0_i32 = arith.constant 0 : i32
    %2 = arith.minsi %1, %c0_i32 : i32
    %c0_i32_0 = arith.constant 0 : i32
    %c0_i32_1 = arith.constant 0 : i32
    return %arg0, %2, %c0_i32_0 : i32, i32, i32
  }
  func.func @transform_2(%arg0: i32, %arg1: i32, %arg2: i32) -> (i32, i32, i32, i32) {
    %c0_i32 = arith.constant 0 : i32
    %c0_i32_0 = arith.constant 0 : i32
    %c0_i32_1 = arith.constant 0 : i32
    return %arg0, %arg1, %c0_i32, %c0_i32_0 : i32, i32, i32, i32
  }
  func.func @transform_3(%arg0: i32, %arg1: i32, %arg2: i32) -> (i32, i32, i32, i32) {
    %c0_i32 = arith.constant 0 : i32
    %c0_i32_0 = arith.constant 0 : i32
    %c0_i32_1 = arith.constant 0 : i32
    return %arg0, %arg1, %c0_i32, %c0_i32_0 : i32, i32, i32, i32
  }
}

</mosaic_0001>

<llo_original>
// kernel: focal_loss.1
$region0: #{focal_loss.1}
  #allocation0 [shape = 'u32[]', space=smem, size = 0x4, offset = 0x4, fixed_abs, tag = 'smem constant byte address 0x4 - core index']
  #allocation1 [shape = 'u32[144,128]{1,0:T(1,128)}', space=vmem, size = 0x12000, scoped, tag = 'internal scratch']
  %s0 = inlined_call_operand.vmem [shape: f32[2,8,128], index: 0, kind: input, shape index: {}]
  %s1 = inlined_call_operand.vmem [shape: f32[2,8,128], index: 1, kind: input, shape index: {}]
  %s2 = inlined_call_operand.vmem [shape: f32[2,1,1,128], index: 2, kind: output, shape index: {0}]
  %s3 = inlined_call_operand.vmem [shape: f32[2,1,1,128], index: 3, kind: output, shape index: {1}]
  %4 = xla_tuple %s2, %s3
  %s5 = sld [smem:[#allocation0]]
  $region53: #{focal_loss.1} parent=0
    _
  %s7 = ssub.s32 1, %s5
  %s8 = scalar_select 0, %s7, %s5
  loop: start=0, step=1, limit=4
  $region2: #{focal_loss.1} parent=0 // loop_pre_header
    _
  $region3: #{focal_loss.1} parent=0 // loop_header
    %s10 = sphi 0, %s14
    %p11 = scmp.ge.s32.totalorder %s10, 4
    %s17 = sphi 0, %s36
    %s18 = sphi 0, %s32
    %s19 = sphi 0, %s28
    %s20 = sphi 0, %s17
    %s21 = sphi 0, %s18
    %s22 = sphi 0, %s19
    %s23 = sphi 0, %s20
    %s24 = sphi 0, %s21
    %s25 = sphi 0, %s22
    %s47 = sphi 0, %s49
    %s50 = sphi 0, %s47
    %s51 = sphi 0, %s50
    %s67 = sphi 0, %s51
    %s81 = sphi 0, %s83
    %s84 = sphi 0, %s81
    %s85 = sphi 0, %s84
    %s101 = sphi 0, %s85
    %s109 = sphi 0, %s111
    %s112 = sphi 0, %s109
    %s113 = sphi 0, %s112
    %s129 = sphi 0, %s113
    %s137 = sphi 0, %s139
    %s140 = sphi 0, %s137
    %s141 = sphi 0, %s140
    %s157 = sphi 0, %s141
  $region4: #{focal_loss.1} parent=0 // loop_header_branch
    %13 = sbr.rel (%p11) target = $region8
  $region5: #{focal_loss.1} parent=0 // loop_body
    %s15 = ssub.s32 %s10, 1
    %s16 = ssub.s32 %s10, 2
    %s26 = sadd.s32 1, %s19
    %p27 = scmp.ge.s32.totalorder %s26, 1
    %s28 = scalar_select %p27, 0, %s26
    %s29 = sadd.s32 1, %s18
    %s30 = scalar_select %p27, %s29, %s18
    %p31 = scmp.ge.s32.totalorder %s30, 1
    %s32 = scalar_select %p31, 0, %s30
    %s33 = sadd.s32 1, %s17
    %s34 = scalar_select %p31, %s33, %s17
    %p35 = scmp.ge.s32.totalorder %s34, 2
    %s36 = scalar_select %p35, 0, %s34
    %s37 = sadd.s32 %s18, %s19
    %p38 = scmp.lt.s32.totalorder %s37, 0
    %s39 = scalar_select %p38, %s37, 0
    %s40 = sadd.s32 %s32, %s28
    %p41 = scmp.lt.s32.totalorder %s40, 0
    %s42 = scalar_select %p41, %s40, 0
    %s43 = ssub.s32 %s17, %s36
    %s44 = ssub.s32 %s39, %s42
    %s45 = sor.u32 %s43, %s44
    %p46 = scmp.eq.s32.totalorder %s45, 0
    %s48 = sadd.s32 %s47, 1
    %s49 = scalar_select %p46, %s47, %s48
    %p52 = pneg %p46
    %p53 = scmp.eq.s32.totalorder %s10, 1
    %p54 = por %p52, %p53
    %p55 = scmp.ne.s32.totalorder %s47, %s50
    %p56 = scmp.eq.s32.totalorder %s10, 0
    %p57 = por %p55, %p56
    %p58 = scmp.ne.s32.totalorder %s47, %s50
    %p59 = scmp.eq.s32.totalorder %s15, 1
    %p60 = por %p58, %p59
    %p61 = scmp.ne.s32.totalorder %s50, %s51
    %p62 = scmp.eq.s32.totalorder %s15, 0
    %p63 = por %p61, %p62
    %p64 = scmp.ne.s32.totalorder %s50, %s51
    %p65 = scmp.eq.s32.totalorder %s16, 1
    %p66 = por %p64, %p65
    %p68 = scmp.ne.s32.totalorder %s51, %s67
    %p69 = scmp.eq.s32.totalorder %s16, 0
    %p70 = por %p68, %p69
    %s71 = sadd.s32 %s18, %s19
    %p72 = scmp.lt.s32.totalorder %s71, 0
    %s73 = scalar_select %p72, %s71, 0
    %s74 = sadd.s32 %s32, %s28
    %p75 = scmp.lt.s32.totalorder %s74, 0
    %s76 = scalar_select %p75, %s74, 0
    %s77 = ssub.s32 %s17, %s36
    %s78 = ssub.s32 %s73, %s76
    %s79 = sor.u32 %s77, %s78
    %p80 = scmp.eq.s32.totalorder %s79, 0
    %s82 = sadd.s32 %s81, 1
    %s83 = scalar_select %p80, %s81, %s82
    %p86 = pneg %p80
    %p87 = scmp.eq.s32.totalorder %s10, 1
    %p88 = por %p86, %p87
    %p89 = scmp.ne.s32.totalorder %s81, %s84
    %p90 = scmp.eq.s32.totalorder %s10, 0
    %p91 = por %p89, %p90
    %p92 = scmp.ne.s32.totalorder %s81, %s84
    %p93 = scmp.eq.s32.totalorder %s15, 1
    %p94 = por %p92, %p93
    %p95 = scmp.ne.s32.totalorder %s84, %s85
    %p96 = scmp.eq.s32.totalorder %s15, 0
    %p97 = por %p95, %p96
    %p98 = scmp.ne.s32.totalorder %s84, %s85
    %p99 = scmp.eq.s32.totalorder %s16, 1
    %p100 = por %p98, %p99
    %p102 = scmp.ne.s32.totalorder %s85, %s101
    %p103 = scmp.eq.s32.totalorder %s16, 0
    %p104 = por %p102, %p103
    %s105 = ssub.s32 %s17, %s36
    %s106 = ssub.s32 %s18, %s32
    %s107 = sor.u32 %s105, %s106
    %p108 = scmp.eq.s32.totalorder %s107, 0
    %s110 = sadd.s32 %s109, 1
    %s111 = scalar_select %p108, %s109, %s110
    %p114 = pneg %p108
    %p115 = scmp.eq.s32.totalorder %s10, 1
    %p116 = por %p114, %p115
    %p117 = scmp.ne.s32.totalorder %s109, %s112
    %p118 = scmp.eq.s32.totalorder %s10, 0
    %p119 = por %p117, %p118
    %p120 = scmp.ne.s32.totalorder %s109, %s112
    %p121 = scmp.eq.s32.totalorder %s15, 1
    %p122 = por %p120, %p121
    %p123 = scmp.ne.s32.totalorder %s112, %s113
    %p124 = scmp.eq.s32.totalorder %s15, 0
    %p125 = por %p123, %p124
    %p126 = scmp.ne.s32.totalorder %s112, %s113
    %p127 = scmp.eq.s32.totalorder %s16, 1
    %p128 = por %p126, %p127
    %p130 = scmp.ne.s32.totalorder %s113, %s129
    %p131 = scmp.eq.s32.totalorder %s16, 0
    %p132 = por %p130, %p131
    %s133 = ssub.s32 %s17, %s36
    %s134 = ssub.s32 %s18, %s32
    %s135 = sor.u32 %s133, %s134
    %p136 = scmp.eq.s32.totalorder %s135, 0
    %s138 = sadd.s32 %s137, 1
    %s139 = scalar_select %p136, %s137, %s138
    %p142 = pneg %p136
    %p143 = scmp.eq.s32.totalorder %s10, 1
    %p144 = por %p142, %p143
    %p145 = scmp.ne.s32.totalorder %s137, %s140
    %p146 = scmp.eq.s32.totalorder %s10, 0
    %p147 = por %p145, %p146
    %p148 = scmp.ne.s32.totalorder %s137, %s140
    %p149 = scmp.eq.s32.totalorder %s15, 1
    %p150 = por %p148, %p149
    %p151 = scmp.ne.s32.totalorder %s140, %s141
    %p152 = scmp.eq.s32.totalorder %s15, 0
    %p153 = por %p151, %p152
    %p154 = scmp.ne.s32.totalorder %s140, %s141
    %p155 = scmp.eq.s32.totalorder %s16, 1
    %p156 = por %p154, %p155
    %p158 = scmp.ne.s32.totalorder %s141, %s157
    %p159 = scmp.eq.s32.totalorder %s16, 0
    %p160 = por %p158, %p159
    %p161 = scmp.le.s32.totalorder 1, %s10
    %p162 = scmp.lt.s32.totalorder %s10, 3
    %p163 = pnand %p161, %p162
    %p164 = pneg %p163
    // Predicated region
    $region9: #{focal_loss.1} parent=5 // pred_check
      _
    $region10: #{focal_loss.1} parent=5 // pred_check_branch
      %166 = sbr.rel (%p163) target = $region12
    $region11: #{focal_loss.1} parent=5 // pred_region
      %s167 = ssub.s32 %s10, 1
    $region12: #{focal_loss.1} parent=5 // pred_fallthru
      _
    %p168 = scmp.lt.s32.totalorder %s10, 2
    // Predicated region
    $region13: #{focal_loss.1} parent=5 // pred_check
      %p169 = pneg %p168
    $region14: #{focal_loss.1} parent=5 // pred_check_branch
      %171 = sbr.rel (%p169) target = $region16
    $region15: #{focal_loss.1} parent=5 // pred_region
      // Predicated region
      $region17: #{focal_loss.1} parent=15 // pred_check
        %p172 = pneg %p57
      $region18: #{focal_loss.1} parent=15 // pred_check_branch
        %174 = sbr.rel (%p172) target = $region20
      $region19: #{focal_loss.1} parent=15 // pred_region
        %s175 = sadd.s32 %s18, %s19
        %p176 = scmp.lt.s32.totalorder %s175, 0
        %s177 = scalar_select %p176, %s175, 0
        %p178 = scmp.lt.s32.totalorder %s17, 1
        %s179 = scalar_select %p178, %s17, 1
        %p180 = scmp.lt.s32.totalorder %s177, 0
        %s181 = scalar_select %p180, %s177, 0
        %s182 = sadd.s32 %s181, %s179
        %s183 = smul.addr %s182, 8
        %s184 = scalar_lea.vmem %s0, %s183
        %s185 = sadd.s32 %s18, %s19
        %p186 = scmp.lt.s32.totalorder %s185, 0
        %s187 = scalar_select %p186, %s185, 0
      $region20: #{focal_loss.1} parent=15 // pred_fallthru
        _
      // Predicated region
      $region21: #{focal_loss.1} parent=15 // pred_check
        %p188 = pneg %p91
      $region22: #{focal_loss.1} parent=15 // pred_check_branch
        %190 = sbr.rel (%p188) target = $region24
      $region23: #{focal_loss.1} parent=15 // pred_region
        %s191 = sadd.s32 %s18, %s19
        %p192 = scmp.lt.s32.totalorder %s191, 0
        %s193 = scalar_select %p192, %s191, 0
        %p194 = scmp.lt.s32.totalorder %s17, 1
        %s195 = scalar_select %p194, %s17, 1
        %p196 = scmp.lt.s32.totalorder %s193, 0
        %s197 = scalar_select %p196, %s193, 0
        %s198 = sadd.s32 %s197, %s195
        %s199 = smul.addr %s198, 8
        %s200 = scalar_lea.vmem %s1, %s199
        %s201 = sadd.s32 %s18, %s19
        %p202 = scmp.lt.s32.totalorder %s201, 0
        %s203 = scalar_select %p202, %s201, 0
      $region24: #{focal_loss.1} parent=15 // pred_fallthru
        _
    $region16: #{focal_loss.1} parent=5 // pred_fallthru
      _
    %p204 = scmp.le.s32.totalorder 1, %s10
    %p205 = scmp.lt.s32.totalorder %s10, 3
    %p206 = pnand %p204, %p205
    %p207 = pneg %p206
    // Predicated region
    $region25: #{focal_loss.1} parent=5 // pred_check
      _
    $region26: #{focal_loss.1} parent=5 // pred_check_branch
      %209 = sbr.rel (%p206) target = $region28
    $region27: #{focal_loss.1} parent=5 // pred_region
      %s210 = ssub.s32 %s10, 1
      %s211 = sadd.s32 %s21, %s22
      %p212 = scmp.lt.s32.totalorder %s211, 0
      %s213 = scalar_select %p212, %s211, 0
      %p214 = scmp.lt.s32.totalorder %s20, 1
      %s215 = scalar_select %p214, %s20, 1
      %p216 = scmp.lt.s32.totalorder %s213, 0
      %s217 = scalar_select %p216, %s213, 0
      %s218 = sadd.s32 %s217, %s215
      %s219 = smul.addr %s218, 8
      %s220 = scalar_lea.vmem %s0, %s219
      %p221 = pneg %p63
      %p222 = pneg %p60
      %s223 = sadd.s32 %s21, %s22
      %p224 = scmp.lt.s32.totalorder %s223, 0
      %s225 = scalar_select %p224, %s223, 0
      %p226 = scmp.lt.s32.totalorder %s20, 1
      %s227 = scalar_select %p226, %s20, 1
      %p228 = scmp.lt.s32.totalorder %s225, 0
      %s229 = scalar_select %p228, %s225, 0
      %s230 = sadd.s32 %s229, %s227
      %s231 = smul.addr %s230, 8
      %s232 = scalar_lea.vmem %s1, %s231
      %p233 = pneg %p97
      %p234 = pneg %p94
      %p235 = pneg %p125
      %p236 = pneg %p122
      %p237 = scmp.lt.s32.totalorder %s20, 1
      %s238 = scalar_select %p237, %s20, 1
      %p239 = scmp.lt.s32.totalorder %s21, 0
      %s240 = scalar_select %p239, %s21, 0
      %s241 = sadd.s32 %s240, %s238
      %s242 = scalar_lea.vmem %s2, %s241
      %p243 = pneg %p153
      %p244 = pneg %p150
      %p245 = scmp.lt.s32.totalorder %s20, 1
      %s246 = scalar_select %p245, %s20, 1
      %p247 = scmp.lt.s32.totalorder %s21, 0
      %s248 = scalar_select %p247, %s21, 0
      %s249 = sadd.s32 %s248, %s246
      %s250 = scalar_lea.vmem %s3, %s249
      %s251 = sadd.s32 %s21, %s22
      %p252 = scmp.lt.s32.totalorder %s251, 0
      %s253 = scalar_select %p252, %s251, 0
      %p254 = scmp.lt.s32.totalorder %s20, 1
      %s255 = scalar_select %p254, %s20, 1
      %p256 = scmp.lt.s32.totalorder %s253, 0
      %s257 = scalar_select %p256, %s253, 0
      %s258 = sadd.s32 %s257, %s255
      %s259 = smul.addr %s258, 8
      %s260 = scalar_lea.vmem %s0, %s259
      %s261 = sadd.s32 %s21, %s22
      %p262 = scmp.lt.s32.totalorder %s261, 0
      %s263 = scalar_select %p262, %s261, 0
      %s264 = sadd.s32 %s21, %s22
      %p265 = scmp.lt.s32.totalorder %s264, 0
      %s266 = scalar_select %p265, %s264, 0
      %p267 = scmp.lt.s32.totalorder %s20, 1
      %s268 = scalar_select %p267, %s20, 1
      %p269 = scmp.lt.s32.totalorder %s266, 0
      %s270 = scalar_select %p269, %s266, 0
      %s271 = sadd.s32 %s270, %s268
      %s272 = smul.addr %s271, 8
      %s273 = scalar_lea.vmem %s1, %s272
      %s274 = sadd.s32 %s21, %s22
      %p275 = scmp.lt.s32.totalorder %s274, 0
      %s276 = scalar_select %p275, %s274, 0
      %p277 = scmp.lt.s32.totalorder %s20, 1
      %s278 = scalar_select %p277, %s20, 1
      %p279 = scmp.lt.s32.totalorder %s21, 0
      %s280 = scalar_select %p279, %s21, 0
      %s281 = sadd.s32 %s280, %s278
      %s282 = scalar_lea.vmem %s2, %s281
      %p283 = scmp.lt.s32.totalorder %s20, 1
      %s284 = scalar_select %p283, %s20, 1
      %p285 = scmp.lt.s32.totalorder %s21, 0
      %s286 = scalar_select %p285, %s21, 0
      %s287 = sadd.s32 %s286, %s284
      %s288 = scalar_lea.vmem %s3, %s287
      %p289 = scmp.eq.s32.totalorder %s22, 0
      // Predicated region
      $region29: #{focal_loss.1} parent=27 // pred_check
        %p290 = pneg %p289
      $region30: #{focal_loss.1} parent=27 // pred_check_branch
        %292 = sbr.rel (%p290) target = $region32
      $region31: #{focal_loss.1} parent=27 // pred_region
        %293 = vst [vmem:[%s282] sm:$0x1] 0.0
        %294 = vst [vmem:[%s288] sm:$0x1] 0.0
      $region32: #{focal_loss.1} parent=27 // pred_fallthru
        _
      %v295 = vld [vmem:[%s260] sm:$0xff]
      %v296 = vld [vmem:[%s273] sm:$0xff]
      %vm297 = vcmp.ne.f32.partialorder %v296, -1.0
      %v298 = vsel %vm297, 1, 0
      %v299 = vcvt.s32.f32 %v298
      %v300 = vmul.f32 %v295, 0.5
      %v301 = vtanh.pop %v300
      %v302 = vmul.f32 %v301, 0.5
      %v303 = vadd.f32 %v302, 0.5
      %vm304 = vcmp.gt.f32.partialorder %v296, 0.5
      %v305 = vsel %vm304, 0.25, 0.75
      %v306 = vmul.f32 %v299, %v305
      %v307 = vsub.f32 %v296, %v303
      %v308 = vand.u32 2147483647, %v307
      %v309 = vsub.f32 1.0, %v308
      %v310 = vsel %vm297, %v309, 1.0
      %v311 = vsub.f32 1.0, %v310
      %v312 = vmul.f32 %v311, %v311
      %v313 = vmul.f32 %v306, %v312
      %v314 = vsub.f32 0.0, %v313
      %v315 = vadd.f32 %v310, 1e-09
      %v316 = vmin.f32 %v315, 1.0
      %v317 = vlog2.pop %v316
      %v318 = vmul.f32 %v317, 0.6931472
      %v319 = vmul.f32 %v314, %v318
      %v320 = vld [vmem:[%s282] sm:$0x1]
      %v321 = vrot.slane %v319, 4
      %v322 = vadd.f32 %v319, %v321
      %v323 = vrot.slane %v322, 2
      %v324 = vadd.f32 %v322, %v323
      %v325 = vrot.slane %v324, 1
      %v326 = vadd.f32 %v324, %v325
      %v327 = vadd.f32 %v320, %v326
      %328 = vst [vmem:[%s282] sm:$0x1] %v327
      %v329 = vld [vmem:[%s288] sm:$0x1]
      %v330 = vrot.slane %v299, 4
      %v331 = vadd.f32 %v299, %v330
      %v332 = vrot.slane %v331, 2
      %v333 = vadd.f32 %v331, %v332
      %v334 = vrot.slane %v333, 1
      %v335 = vadd.f32 %v333, %v334
      %v336 = vadd.f32 %v329, %v335
      %337 = vst [vmem:[%s288] sm:$0x1] %v336
      %p338 = scmp.lt.s32.totalorder %s20, 1
      %s339 = scalar_select %p338, %s20, 1
      %p340 = scmp.lt.s32.totalorder %s21, 0
      %s341 = scalar_select %p340, %s21, 0
      %s342 = sadd.s32 %s341, %s339
      %s343 = scalar_lea.vmem %s2, %s342
      %p344 = scmp.lt.s32.totalorder %s20, 1
      %s345 = scalar_select %p344, %s20, 1
      %p346 = scmp.lt.s32.totalorder %s21, 0
      %s347 = scalar_select %p346, %s21, 0
      %s348 = sadd.s32 %s347, %s345
      %s349 = scalar_lea.vmem %s3, %s348
      // Predicated region
      $region33: #{focal_loss.1} parent=27 // pred_check
        %p350 = pneg %p122
      $region34: #{focal_loss.1} parent=27 // pred_check_branch
        %352 = sbr.rel (%p350) target = $region36
      $region35: #{focal_loss.1} parent=27 // pred_region
        _
      $region36: #{focal_loss.1} parent=27 // pred_fallthru
        _
      // Predicated region
      $region37: #{focal_loss.1} parent=27 // pred_check
        %p353 = pneg %p150
      $region38: #{focal_loss.1} parent=27 // pred_check_branch
        %355 = sbr.rel (%p353) target = $region40
      $region39: #{focal_loss.1} parent=27 // pred_region
        _
      $region40: #{focal_loss.1} parent=27 // pred_fallthru
        _
    $region28: #{focal_loss.1} parent=5 // pred_fallthru
      _
    %p356 = scmp.le.s32.totalorder 2, %s10
    // Predicated region
    $region41: #{focal_loss.1} parent=5 // pred_check
      %p357 = pneg %p356
    $region42: #{focal_loss.1} parent=5 // pred_check_branch
      %359 = sbr.rel (%p357) target = $region44
    $region43: #{focal_loss.1} parent=5 // pred_region
      %s360 = ssub.s32 %s10, 2
      // Predicated region
      $region45: #{focal_loss.1} parent=43 // pred_check
        %p361 = pneg %p128
      $region46: #{focal_loss.1} parent=43 // pred_check_branch
        %363 = sbr.rel (%p361) target = $region48
      $region47: #{focal_loss.1} parent=43 // pred_region
        %p364 = scmp.lt.s32.totalorder %s23, 1
        %s365 = scalar_select %p364, %s23, 1
        %p366 = scmp.lt.s32.totalorder %s24, 0
        %s367 = scalar_select %p366, %s24, 0
        %s368 = sadd.s32 %s367, %s365
        %s369 = scalar_lea.vmem %s2, %s368
      $region48: #{focal_loss.1} parent=43 // pred_fallthru
        _
      // Predicated region
      $region49: #{focal_loss.1} parent=43 // pred_check
        %p370 = pneg %p156
      $region50: #{focal_loss.1} parent=43 // pred_check_branch
        %372 = sbr.rel (%p370) target = $region52
      $region51: #{focal_loss.1} parent=43 // pred_region
        %p373 = scmp.lt.s32.totalorder %s23, 1
        %s374 = scalar_select %p373, %s23, 1
        %p375 = scmp.lt.s32.totalorder %s24, 0
        %s376 = scalar_select %p375, %s24, 0
        %s377 = sadd.s32 %s376, %s374
        %s378 = scalar_lea.vmem %s3, %s377
      $region52: #{focal_loss.1} parent=43 // pred_fallthru
        _
    $region44: #{focal_loss.1} parent=5 // pred_fallthru
      _
  $region6: #{focal_loss.1} parent=0 // loop_footer
    %s14 = sadd.s32 1, %s10
  $region7: #{focal_loss.1} parent=0 // loop_footer_branch
    %9 = sbr.rel target = $region3
  $region8: #{focal_loss.1} parent=0 // loop_exit
    _

</llo_original>
